<compile_context>
chip_gen: v7x
topology: tpu7x:2x2x1
jax: 0.10.0
libtpu: 0.0.40
codegen_flags: <defaults>
</compile_context>

<pallas_src>
import functools

import jax
import jax.numpy as jnp
import numpy as np
from jax import lax
from jax.experimental import pallas as pl
from jax.experimental.pallas import tpu as pltpu


def _tap_slab(x, m_ref, k, shift, mask_needed):
    """x[c, p + s] for one filter tap (zeros where the tap is out of bounds).

    `shift` is the precomputed non-negative roll amount (= (-s) % HWp); the
    0/1 edge mask kills every wrapped / zero-padding lane, so the circular
    roll is exact.
    """
    xs = pltpu.roll(x, shift, axis=1) if shift else x
    if mask_needed:
        xs = xs * m_ref[k:k + 1, :]
    return xs


def _store_block(blocks, b_ref, o_ref, n):
    """Write per-sample (Cout, HWp) blocks; bias only on global sample 0."""
    for b, blk in enumerate(blocks):
        if b == 0:
            @pl.when(n == 0)
            def _():
                o_ref[0] = (blk + b_ref[...]).astype(o_ref.dtype)

            @pl.when(n != 0)
            def _():
                o_ref[0] = blk.astype(o_ref.dtype)
        else:
            o_ref[b] = blk.astype(o_ref.dtype)


def _conv_kernel_im2col(x_ref, w_ref, m_ref, b_ref, o_ref, p_ref, *,
                        Wd, HWp, KH, KW, PH, PW, Cin, Cin_p, B_tile,
                        mask_needed):
    """Small-Cin path: build im2col patch matrix, one fused MXU matmul.

    x_ref : (B_tile, Cin, HWp)      flattened samples (spatial on lanes)
    w_ref : (Cout, KT*Cin_p)        weight, tap-major columns, Cin padded
    m_ref : (KT, HWp)               0/1 edge masks
    b_ref : (Cout, 1)               bias
    o_ref : (B_tile, Cout, HWp)     lane-dense output
    p_ref : (KT*Cin_p, B_tile*HWp)  VMEM im2col patch matrix (persists)
    """
    n = pl.program_id(0)
    KT = KH * KW

    # Zero ONLY the Cin->Cin_p pad rows, once.  They are never overwritten and
    # the scratch persists across grid steps.  (When pad rows exist the grid
    # axis is marked "arbitrary" in the wrapper so step 0 runs on every core.)
    if Cin_p != Cin:
        @pl.when(n == 0)
        def _():
            for k in range(KT):
                p_ref[k * Cin_p + Cin:(k + 1) * Cin_p, :] = jnp.zeros(
                    (Cin_p - Cin, p_ref.shape[1]), p_ref.dtype)

    # im2col via static lane rolls (XLU) + edge masks; all stores land at
    # sublane offsets that are multiples of 8 (Cin_p) and 128-aligned lanes.
    for b in range(B_tile):
        x = x_ref[b]                                        # (Cin, HWp)
        for kh in range(KH):
            for kw in range(KW):
                k = kh * KW + kw
                s = (kh - PH) * Wd + (kw - PW)
                xs = _tap_slab(x, m_ref, k, (-s) % HWp if s else 0,
                               mask_needed[k])
                p_ref[k * Cin_p:k * Cin_p + Cin,
                      b * HWp:(b + 1) * HWp] = xs

    # One MXU matmul over all taps and all samples of this block, f32 acc.
    out = jnp.dot(w_ref[...], p_ref[...], preferred_element_type=jnp.float32)
    _store_block([out[:, b * HWp:(b + 1) * HWp] for b in range(B_tile)],
                 b_ref, o_ref, n)


def _conv_kernel_pertap(x_ref, w_ref, m_ref, b_ref, o_ref, *,
                        Wd, HWp, KH, KW, PH, PW, B_tile, mask_needed):
    """Large-Cin path: accumulate per-tap matmuls, no im2col scratch.

    x_ref : (B_tile, Cin, HWp)
    w_ref : (KT, Cout, Cin)         one (Cout, Cin) slab per filter tap
    m_ref : (KT, HWp)
    b_ref : (Cout, 1)
    o_ref : (B_tile, Cout, HWp)
    """
    n = pl.program_id(0)
    blocks = []
    for b in range(B_tile):
        x = x_ref[b]                                        # (Cin, HWp)
        acc = None
        for kh in range(KH):
            for kw in range(KW):
                k = kh * KW + kw
                s = (kh - PH) * Wd + (kw - PW)
                xs = _tap_slab(x, m_ref, k, (-s) % HWp if s else 0,
                               mask_needed[k])
                t = jnp.dot(w_ref[k], xs, preferred_element_type=jnp.float32)
                acc = t if acc is None else acc + t
        blocks.append(acc)
    _store_block(blocks, b_ref, o_ref, n)


def _pair(v):
    if isinstance(v, (tuple, list)):
        return int(v[0]), int(v[1])
    return int(v), int(v)


def _round_up(v, m):
    return ((v + m - 1) // m) * m


def conv_first_sample_bias(x, weight, bias, *, stride=1, padding=1, dilation=1,
                           groups=1, compute_dtype=None, pertap_min_cin=128,
                           max_batch_tile=8):
    """Forward of the modified `Conv` module.

    x:      (N, Cin, H, W)
    weight: (Cout, Cin, KH, KW)   (PyTorch OIHW layout)
    bias:   (Cout,)
    returns (N, Cout, H, W) with bias added only to sample 0.
    """
    N, Cin, H, W = x.shape
    Cout, Cin_w, KH, KW = weight.shape
    sh, sw = _pair(stride)
    ph, pw = _pair(padding)
    dh, dw = _pair(dilation)
    if (sh, sw) != (1, 1) or (dh, dw) != (1, 1) or groups != 1 or Cin_w != Cin:
        # TODO(synk): general stride / dilation / groups path.
        raise NotImplementedError("only stride=1, dilation=1, groups=1 supported")
    if 2 * ph != KH - 1 or 2 * pw != KW - 1:
        # TODO(synk): non-"same" padding needs an output-column compaction step.
        raise NotImplementedError("only 'same' symmetric padding supported")

    HW = H * W
    HWp = _round_up(HW, 128)                  # lane-dense / tile-aligned spatial
    KT = KH * KW
    cdt = jnp.dtype(compute_dtype) if compute_dtype is not None else jnp.dtype(x.dtype)

    # Batch tile: largest divisor of N not exceeding max_batch_tile.
    B_tile = max(d for d in range(1, min(N, max_batch_tile) + 1) if N % d == 0)

    # 0/1 edge masks per filter tap (compile-time constants):
    # mask[k, h*W+w] == 1 iff tap (kh, kw) of output pixel (h, w) reads a true
    # in-bounds input pixel (kills zero-padding taps and row-wrap lanes).
    hh = np.arange(H)[:, None]
    ww = np.arange(W)[None, :]
    masks = np.zeros((KT, HWp), np.float32)
    mask_needed = []
    for kh in range(KH):
        for kw in range(KW):
            ih, iw = hh + kh - ph, ww + kw - pw
            valid = ((ih >= 0) & (ih < H) & (iw >= 0) & (iw < W)).astype(np.float32)
            masks[kh * KW + kw, :HW] = valid.reshape(HW)
            mask_needed.append(bool((valid == 0).any()))
    masks = jnp.asarray(masks, dtype=cdt)
    mask_needed = tuple(mask_needed)

    # Layout-only glue (no spatial transpose; HW pad only if HW % 128 != 0).
    x_flat = x.reshape(N, Cin, HW).astype(cdt)
    if HWp != HW:
        x_flat = jnp.pad(x_flat, ((0, 0), (0, 0), (0, HWp - HW)))
    b_mat = bias.reshape(Cout, 1).astype(jnp.float32)

    use_pertap = Cin >= pertap_min_cin
    if use_pertap:
        # Per-tap weight slabs: (KT, Cout, Cin).  No im2col scratch at all.
        Cin_p = Cin
        w_arr = jnp.transpose(weight, (2, 3, 0, 1)).reshape(KT, Cout, Cin).astype(cdt)
        w_spec = pl.BlockSpec((KT, Cout, Cin), lambda n: (0, 0, 0))
        kernel = functools.partial(
            _conv_kernel_pertap, Wd=W, HWp=HWp, KH=KH, KW=KW, PH=ph, PW=pw,
            B_tile=B_tile, mask_needed=mask_needed)
        scratch = []
        semantics = ("parallel",)
        scratch_bytes = 0
    else:
        # Fused im2col path: tap-major weight columns, Cin padded to Cin_p.
        Cin_p = _round_up(Cin, 8)
        Km = KT * Cin_p
        w_arr = jnp.transpose(weight, (0, 2, 3, 1))                 # (Cout,KH,KW,Cin)
        w_arr = jnp.pad(w_arr, ((0, 0), (0, 0), (0, 0), (0, Cin_p - Cin)))
        w_arr = w_arr.reshape(Cout, Km).astype(cdt)
        w_spec = pl.BlockSpec((Cout, Km), lambda n: (0, 0))
        kernel = functools.partial(
            _conv_kernel_im2col, Wd=W, HWp=HWp, KH=KH, KW=KW, PH=ph, PW=pw,
            Cin=Cin, Cin_p=Cin_p, B_tile=B_tile, mask_needed=mask_needed)
        scratch = [pltpu.VMEM((Km, B_tile * HWp), cdt)]
        scratch_bytes = Km * B_tile * HWp * jnp.dtype(cdt).itemsize
        # Pad rows of the scratch are zeroed only at grid step 0, so the batch
        # axis must not be sharded across cores when pad rows exist.
        semantics = ("parallel",) if Cin_p == Cin else ("arbitrary",)

    # Explicit VMEM budget (double-buffered blocks + broadcast operands +
    # scratch + matmul result), with headroom; clamp to [32 MiB, 64 MiB].
    isz = jnp.dtype(cdt).itemsize
    osz = jnp.dtype(x.dtype).itemsize
    w_bytes = int(np.prod(w_arr.shape)) * isz
    m_bytes = KT * HWp * isz
    vmem_bytes = (2 * B_tile * Cin * HWp * isz
                  + 2 * B_tile * Cout * HWp * osz
                  + 2 * (w_bytes + m_bytes + Cout * 4)
                  + scratch_bytes
                  + 2 * B_tile * Cout * HWp * 4)
    vmem_limit = int(min(64 << 20, max((3 * vmem_bytes) // 2 + (4 << 20), 32 << 20)))

    cost = pl.CostEstimate(
        flops=2 * N * HW * Cout * Cin * KH * KW,
        transcendentals=0,
        bytes_accessed=int(N * Cin * HWp * isz + w_bytes + m_bytes + Cout * 4
                           + N * Cout * HWp * osz))

    out_flat = pl.pallas_call(
        kernel,
        out_shape=jax.ShapeDtypeStruct((N, Cout, HWp), x.dtype),
        grid_spec=pltpu.PrefetchScalarGridSpec(
            num_scalar_prefetch=0,
            grid=(N // B_tile,),                         # B_tile samples / step
            in_specs=[
                pl.BlockSpec((B_tile, Cin, HWp), lambda n: (n, 0, 0)),
                w_spec,
                pl.BlockSpec((KT, HWp), lambda n: (0, 0)),
                pl.BlockSpec((Cout, 1), lambda n: (0, 0)),
            ],
            out_specs=pl.BlockSpec((B_tile, Cout, HWp), lambda n: (n, 0, 0)),
            scratch_shapes=scratch,
        ),
        compiler_params=pltpu.CompilerParams(
            dimension_semantics=semantics,
            vmem_limit_bytes=vmem_limit),
        cost_estimate=cost,
    )(x_flat, w_arr, masks, b_mat)

    out_flat = out_flat[:, :, :HW] if HWp != HW else out_flat
    return out_flat.reshape(N, Cout, H, W)


if __name__ == "__main__":
    key = jax.random.PRNGKey(0)

    def _reference(x, w, b, pad):
        y = lax.conv_general_dilated(
            x, w, window_strides=(1, 1), padding=((pad, pad), (pad, pad)),
            dimension_numbers=("NCHW", "OIHW", "NCHW"))
        return y.at[0].add(b[:, None, None])

    k1, k2, k3, k4, k5, k6 = jax.random.split(key, 6)

    # Case 1: default fused-im2col path (small Cin), shapes consistent with
    # nn.Conv2d(4, 8, kernel_size=3, padding=1).
    N, Cin, H, W = 2, 4, 16, 16
    Cout, KH, KW = 8, 3, 3
    x = jax.random.normal(k1, (N, Cin, H, W), dtype=jnp.float32)
    weight = jax.random.normal(k2, (Cout, Cin, KH, KW), dtype=jnp.float32) * 0.1
    bias = jax.random.normal(k3, (Cout,), dtype=jnp.float32)

    y = jax.block_until_ready(conv_first_sample_bias(x, weight, bias, padding=1))
    y_ref = _reference(x, weight, bias, 1)
    assert y.shape == (N, Cout, H, W)
    assert jnp.allclose(y, y_ref, atol=1e-3, rtol=1e-3), \
        float(jnp.max(jnp.abs(y - y_ref)))

    # Case 2: per-tap accumulation path (forced) + H*W padded to 128 lanes.
    N2, Cin2, H2, W2 = 2, 8, 8, 8
    x2 = jax.random.normal(k4, (N2, Cin2, H2, W2), dtype=jnp.float32)
    w2 = jax.random.normal(k5, (Cout, Cin2, KH, KW), dtype=jnp.float32) * 0.1
    b2 = jax.random.normal(k6, (Cout,), dtype=jnp.float32)

    y2 = jax.block_until_ready(
        conv_first_sample_bias(x2, w2, b2, padding=1, pertap_min_cin=1))
    y2_ref = _reference(x2, w2, b2, 1)
    assert y2.shape == (N2, Cout, H2, W2)
    assert jnp.allclose(y2, y2_ref, atol=1e-3, rtol=1e-3), \
        float(jnp.max(jnp.abs(y2 - y2_ref)))

    print("KERNEL_OK")
</pallas_src>

<mosaic_0001>
module attributes {stable_mosaic.version = 11 : i64} {
  func.func @_conv_kernel_im2col(%arg0: i32, %arg1: memref<2x4x256xf32, #tpu.memory_space<vmem>>, %arg2: memref<8x72xf32, #tpu.memory_space<vmem>>, %arg3: memref<9x256xf32, #tpu.memory_space<vmem>>, %arg4: memref<8x1xf32, #tpu.memory_space<vmem>>, %arg5: memref<2x8x256xf32, #tpu.memory_space<vmem>>, %arg6: memref<72x512xf32, #tpu.memory_space<vmem>>) attributes {dimension_semantics = [#tpu.dimension_semantics<arbitrary>], iteration_bounds = array<i64: 1>, scalar_prefetch = 0 : i64, scratch_operands = 1 : i64, tpu.core_type = #tpu.core_type<tc>, window_params = [{transform_indices = @transform_0, window_bounds = array<i64: 2, 4, 256>}, {pipeline_mode = #tpu.pipeline_mode<synchronous>, transform_indices = @transform_1, window_bounds = array<i64: 8, 72>}, {pipeline_mode = #tpu.pipeline_mode<synchronous>, transform_indices = @transform_2, window_bounds = array<i64: 9, 256>}, {pipeline_mode = #tpu.pipeline_mode<synchronous>, transform_indices = @transform_3, window_bounds = array<i64: 8, 1>}, {transform_indices = @transform_4, window_bounds = array<i64: 2, 8, 256>}]} {
    %c0_i32 = arith.constant 0 : i32
    %0 = arith.cmpi eq, %arg0, %c0_i32 : i32
    %1 = arith.extui %0 : i1 to i32
    %c0_i32_0 = arith.constant 0 : i32
    %2 = arith.cmpi ne, %1, %c0_i32_0 : i32
    scf.if %2 {
      %cst_78 = arith.constant 0.000000e+00 : f32
      %103 = vector.broadcast %cst_78 : f32 to vector<4x512xf32>
      %c4 = arith.constant 4 : index
      %c0_79 = arith.constant 0 : index
      %104 = vector.load %arg6[%c4, %c0_79] : memref<72x512xf32, #tpu.memory_space<vmem>>, vector<4x512xf32>
      tpu.vector_store %arg6[%c4, %c0_79], %103 {strides = array<i32>} : memref<72x512xf32, #tpu.memory_space<vmem>>, vector<4x512xf32>,
      %cst_80 = arith.constant 0.000000e+00 : f32
      %105 = vector.broadcast %cst_80 : f32 to vector<4x512xf32>
      %c12 = arith.constant 12 : index
      %c0_81 = arith.constant 0 : index
      %106 = vector.load %arg6[%c12, %c0_81] : memref<72x512xf32, #tpu.memory_space<vmem>>, vector<4x512xf32>
      tpu.vector_store %arg6[%c12, %c0_81], %105 {strides = array<i32>} : memref<72x512xf32, #tpu.memory_space<vmem>>, vector<4x512xf32>,
      %cst_82 = arith.constant 0.000000e+00 : f32
      %107 = vector.broadcast %cst_82 : f32 to vector<4x512xf32>
      %c20 = arith.constant 20 : index
      %c0_83 = arith.constant 0 : index
      %108 = vector.load %arg6[%c20, %c0_83] : memref<72x512xf32, #tpu.memory_space<vmem>>, vector<4x512xf32>
      tpu.vector_store %arg6[%c20, %c0_83], %107 {strides = array<i32>} : memref<72x512xf32, #tpu.memory_space<vmem>>, vector<4x512xf32>,
      %cst_84 = arith.constant 0.000000e+00 : f32
      %109 = vector.broadcast %cst_84 : f32 to vector<4x512xf32>
      %c28 = arith.constant 28 : index
      %c0_85 = arith.constant 0 : index
      %110 = vector.load %arg6[%c28, %c0_85] : memref<72x512xf32, #tpu.memory_space<vmem>>, vector<4x512xf32>
      tpu.vector_store %arg6[%c28, %c0_85], %109 {strides = array<i32>} : memref<72x512xf32, #tpu.memory_space<vmem>>, vector<4x512xf32>,
      %cst_86 = arith.constant 0.000000e+00 : f32
      %111 = vector.broadcast %cst_86 : f32 to vector<4x512xf32>
      %c36 = arith.constant 36 : index
      %c0_87 = arith.constant 0 : index
      %112 = vector.load %arg6[%c36, %c0_87] : memref<72x512xf32, #tpu.memory_space<vmem>>, vector<4x512xf32>
      tpu.vector_store %arg6[%c36, %c0_87], %111 {strides = array<i32>} : memref<72x512xf32, #tpu.memory_space<vmem>>, vector<4x512xf32>,
      %cst_88 = arith.constant 0.000000e+00 : f32
      %113 = vector.broadcast %cst_88 : f32 to vector<4x512xf32>
      %c44 = arith.constant 44 : index
      %c0_89 = arith.constant 0 : index
      %114 = vector.load %arg6[%c44, %c0_89] : memref<72x512xf32, #tpu.memory_space<vmem>>, vector<4x512xf32>
      tpu.vector_store %arg6[%c44, %c0_89], %113 {strides = array<i32>} : memref<72x512xf32, #tpu.memory_space<vmem>>, vector<4x512xf32>,
      %cst_90 = arith.constant 0.000000e+00 : f32
      %115 = vector.broadcast %cst_90 : f32 to vector<4x512xf32>
      %c52 = arith.constant 52 : index
      %c0_91 = arith.constant 0 : index
      %116 = vector.load %arg6[%c52, %c0_91] : memref<72x512xf32, #tpu.memory_space<vmem>>, vector<4x512xf32>
      tpu.vector_store %arg6[%c52, %c0_91], %115 {strides = array<i32>} : memref<72x512xf32, #tpu.memory_space<vmem>>, vector<4x512xf32>,
      %cst_92 = arith.constant 0.000000e+00 : f32
      %117 = vector.broadcast %cst_92 : f32 to vector<4x512xf32>
      %c60 = arith.constant 60 : index
      %c0_93 = arith.constant 0 : index
      %118 = vector.load %arg6[%c60, %c0_93] : memref<72x512xf32, #tpu.memory_space<vmem>>, vector<4x512xf32>
      tpu.vector_store %arg6[%c60, %c0_93], %117 {strides = array<i32>} : memref<72x512xf32, #tpu.memory_space<vmem>>, vector<4x512xf32>,
      %cst_94 = arith.constant 0.000000e+00 : f32
      %119 = vector.broadcast %cst_94 : f32 to vector<4x512xf32>
      %c68 = arith.constant 68 : index
      %c0_95 = arith.constant 0 : index
      %120 = vector.load %arg6[%c68, %c0_95] : memref<72x512xf32, #tpu.memory_space<vmem>>, vector<4x512xf32>
      tpu.vector_store %arg6[%c68, %c0_95], %119 {strides = array<i32>} : memref<72x512xf32, #tpu.memory_space<vmem>>, vector<4x512xf32>,
    } else {
    }
    %c0 = arith.constant 0 : index
    %c0_1 = arith.constant 0 : index
    %c0_2 = arith.constant 0 : index
    %3 = vector.load %arg1[%c0, %c0_1, %c0_2] : memref<2x4x256xf32, #tpu.memory_space<vmem>>, vector<1x4x256xf32>
    %4 = vector.shape_cast %3 : vector<1x4x256xf32> to vector<4x256xf32>
    %c17_i32 = arith.constant 17 : i32
    %5 = tpu.dynamic_rotate %4 by %c17_i32 dim 1 : vector<4x256xf32>, i32 -> vector<4x256xf32>
    %c0_3 = arith.constant 0 : index
    %c0_4 = arith.constant 0 : index
    %6 = vector.load %arg3[%c0_3, %c0_4] : memref<9x256xf32, #tpu.memory_space<vmem>>, vector<1x256xf32>
    %7 = vector.broadcast %6 : vector<1x256xf32> to vector<4x256xf32>
    %8 = arith.mulf %5, %7 : vector<4x256xf32>
    %c0_5 = arith.constant 0 : index
    %c0_6 = arith.constant 0 : index
    %9 = vector.load %arg6[%c0_5, %c0_6] : memref<72x512xf32, #tpu.memory_space<vmem>>, vector<4x256xf32>
    tpu.vector_store %arg6[%c0_5, %c0_6], %8 {strides = array<i32>} : memref<72x512xf32, #tpu.memory_space<vmem>>, vector<4x256xf32>,
    %c16_i32 = arith.constant 16 : i32
    %10 = tpu.dynamic_rotate %4 by %c16_i32 dim 1 : vector<4x256xf32>, i32 -> vector<4x256xf32>
    %c1 = arith.constant 1 : index
    %c0_7 = arith.constant 0 : index
    %11 = vector.load %arg3[%c1, %c0_7] : memref<9x256xf32, #tpu.memory_space<vmem>>, vector<1x256xf32>
    %12 = vector.broadcast %11 : vector<1x256xf32> to vector<4x256xf32>
    %13 = arith.mulf %10, %12 : vector<4x256xf32>
    %c8 = arith.constant 8 : index
    %c0_8 = arith.constant 0 : index
    %14 = vector.load %arg6[%c8, %c0_8] : memref<72x512xf32, #tpu.memory_space<vmem>>, vector<4x256xf32>
    tpu.vector_store %arg6[%c8, %c0_8], %13 {strides = array<i32>} : memref<72x512xf32, #tpu.memory_space<vmem>>, vector<4x256xf32>,
    %c15_i32 = arith.constant 15 : i32
    %15 = tpu.dynamic_rotate %4 by %c15_i32 dim 1 : vector<4x256xf32>, i32 -> vector<4x256xf32>
    %c2 = arith.constant 2 : index
    %c0_9 = arith.constant 0 : index
    %16 = vector.load %arg3[%c2, %c0_9] : memref<9x256xf32, #tpu.memory_space<vmem>>, vector<1x256xf32>
    %17 = vector.broadcast %16 : vector<1x256xf32> to vector<4x256xf32>
    %18 = arith.mulf %15, %17 : vector<4x256xf32>
    %c16 = arith.constant 16 : index
    %c0_10 = arith.constant 0 : index
    %19 = vector.load %arg6[%c16, %c0_10] : memref<72x512xf32, #tpu.memory_space<vmem>>, vector<4x256xf32>
    tpu.vector_store %arg6[%c16, %c0_10], %18 {strides = array<i32>} : memref<72x512xf32, #tpu.memory_space<vmem>>, vector<4x256xf32>,
    %c1_i32 = arith.constant 1 : i32
    %20 = tpu.dynamic_rotate %4 by %c1_i32 dim 1 : vector<4x256xf32>, i32 -> vector<4x256xf32>
    %c3 = arith.constant 3 : index
    %c0_11 = arith.constant 0 : index
    %21 = vector.load %arg3[%c3, %c0_11] : memref<9x256xf32, #tpu.memory_space<vmem>>, vector<1x256xf32>
    %22 = vector.broadcast %21 : vector<1x256xf32> to vector<4x256xf32>
    %23 = arith.mulf %20, %22 : vector<4x256xf32>
    %c24 = arith.constant 24 : index
    %c0_12 = arith.constant 0 : index
    %24 = vector.load %arg6[%c24, %c0_12] : memref<72x512xf32, #tpu.memory_space<vmem>>, vector<4x256xf32>
    tpu.vector_store %arg6[%c24, %c0_12], %23 {strides = array<i32>} : memref<72x512xf32, #tpu.memory_space<vmem>>, vector<4x256xf32>,
    %c32 = arith.constant 32 : index
    %c0_13 = arith.constant 0 : index
    %25 = vector.load %arg6[%c32, %c0_13] : memref<72x512xf32, #tpu.memory_space<vmem>>, vector<4x256xf32>
    tpu.vector_store %arg6[%c32, %c0_13], %4 {strides = array<i32>} : memref<72x512xf32, #tpu.memory_space<vmem>>, vector<4x256xf32>,
    %c255_i32 = arith.constant 255 : i32
    %26 = tpu.dynamic_rotate %4 by %c255_i32 dim 1 : vector<4x256xf32>, i32 -> vector<4x256xf32>
    %c5 = arith.constant 5 : index
    %c0_14 = arith.constant 0 : index
    %27 = vector.load %arg3[%c5, %c0_14] : memref<9x256xf32, #tpu.memory_space<vmem>>, vector<1x256xf32>
    %28 = vector.broadcast %27 : vector<1x256xf32> to vector<4x256xf32>
    %29 = arith.mulf %26, %28 : vector<4x256xf32>
    %c40 = arith.constant 40 : index
    %c0_15 = arith.constant 0 : index
    %30 = vector.load %arg6[%c40, %c0_15] : memref<72x512xf32, #tpu.memory_space<vmem>>, vector<4x256xf32>
    tpu.vector_store %arg6[%c40, %c0_15], %29 {strides = array<i32>} : memref<72x512xf32, #tpu.memory_space<vmem>>, vector<4x256xf32>,
    %c241_i32 = arith.constant 241 : i32
    %31 = tpu.dynamic_rotate %4 by %c241_i32 dim 1 : vector<4x256xf32>, i32 -> vector<4x256xf32>
    %c6 = arith.constant 6 : index
    %c0_16 = arith.constant 0 : index
    %32 = vector.load %arg3[%c6, %c0_16] : memref<9x256xf32, #tpu.memory_space<vmem>>, vector<1x256xf32>
    %33 = vector.broadcast %32 : vector<1x256xf32> to vector<4x256xf32>
    %34 = arith.mulf %31, %33 : vector<4x256xf32>
    %c48 = arith.constant 48 : index
    %c0_17 = arith.constant 0 : index
    %35 = vector.load %arg6[%c48, %c0_17] : memref<72x512xf32, #tpu.memory_space<vmem>>, vector<4x256xf32>
    tpu.vector_store %arg6[%c48, %c0_17], %34 {strides = array<i32>} : memref<72x512xf32, #tpu.memory_space<vmem>>, vector<4x256xf32>,
    %c240_i32 = arith.constant 240 : i32
    %36 = tpu.dynamic_rotate %4 by %c240_i32 dim 1 : vector<4x256xf32>, i32 -> vector<4x256xf32>
    %c7 = arith.constant 7 : index
    %c0_18 = arith.constant 0 : index
    %37 = vector.load %arg3[%c7, %c0_18] : memref<9x256xf32, #tpu.memory_space<vmem>>, vector<1x256xf32>
    %38 = vector.broadcast %37 : vector<1x256xf32> to vector<4x256xf32>
    %39 = arith.mulf %36, %38 : vector<4x256xf32>
    %c56 = arith.constant 56 : index
    %c0_19 = arith.constant 0 : index
    %40 = vector.load %arg6[%c56, %c0_19] : memref<72x512xf32, #tpu.memory_space<vmem>>, vector<4x256xf32>
    tpu.vector_store %arg6[%c56, %c0_19], %39 {strides = array<i32>} : memref<72x512xf32, #tpu.memory_space<vmem>>, vector<4x256xf32>,
    %c239_i32 = arith.constant 239 : i32
    %41 = tpu.dynamic_rotate %4 by %c239_i32 dim 1 : vector<4x256xf32>, i32 -> vector<4x256xf32>
    %c8_20 = arith.constant 8 : index
    %c0_21 = arith.constant 0 : index
    %42 = vector.load %arg3[%c8_20, %c0_21] : memref<9x256xf32, #tpu.memory_space<vmem>>, vector<1x256xf32>
    %43 = vector.broadcast %42 : vector<1x256xf32> to vector<4x256xf32>
    %44 = arith.mulf %41, %43 : vector<4x256xf32>
    %c64 = arith.constant 64 : index
    %c0_22 = arith.constant 0 : index
    %45 = vector.load %arg6[%c64, %c0_22] : memref<72x512xf32, #tpu.memory_space<vmem>>, vector<4x256xf32>
    tpu.vector_store %arg6[%c64, %c0_22], %44 {strides = array<i32>} : memref<72x512xf32, #tpu.memory_space<vmem>>, vector<4x256xf32>,
    %c1_23 = arith.constant 1 : index
    %c0_24 = arith.constant 0 : index
    %c0_25 = arith.constant 0 : index
    %46 = vector.load %arg1[%c1_23, %c0_24, %c0_25] : memref<2x4x256xf32, #tpu.memory_space<vmem>>, vector<1x4x256xf32>
    %47 = vector.shape_cast %46 : vector<1x4x256xf32> to vector<4x256xf32>
    %c17_i32_26 = arith.constant 17 : i32
    %48 = tpu.dynamic_rotate %47 by %c17_i32_26 dim 1 : vector<4x256xf32>, i32 -> vector<4x256xf32>
    %c0_27 = arith.constant 0 : index
    %c0_28 = arith.constant 0 : index
    %49 = vector.load %arg3[%c0_27, %c0_28] : memref<9x256xf32, #tpu.memory_space<vmem>>, vector<1x256xf32>
    %50 = vector.broadcast %49 : vector<1x256xf32> to vector<4x256xf32>
    %51 = arith.mulf %48, %50 : vector<4x256xf32>
    %c0_29 = arith.constant 0 : index
    %c256 = arith.constant 256 : index
    %52 = vector.load %arg6[%c0_29, %c256] : memref<72x512xf32, #tpu.memory_space<vmem>>, vector<4x256xf32>
    tpu.vector_store %arg6[%c0_29, %c256], %51 {strides = array<i32>} : memref<72x512xf32, #tpu.memory_space<vmem>>, vector<4x256xf32>,
    %c16_i32_30 = arith.constant 16 : i32
    %53 = tpu.dynamic_rotate %47 by %c16_i32_30 dim 1 : vector<4x256xf32>, i32 -> vector<4x256xf32>
    %c1_31 = arith.constant 1 : index
    %c0_32 = arith.constant 0 : index
    %54 = vector.load %arg3[%c1_31, %c0_32] : memref<9x256xf32, #tpu.memory_space<vmem>>, vector<1x256xf32>
    %55 = vector.broadcast %54 : vector<1x256xf32> to vector<4x256xf32>
    %56 = arith.mulf %53, %55 : vector<4x256xf32>
    %c8_33 = arith.constant 8 : index
    %c256_34 = arith.constant 256 : index
    %57 = vector.load %arg6[%c8_33, %c256_34] : memref<72x512xf32, #tpu.memory_space<vmem>>, vector<4x256xf32>
    tpu.vector_store %arg6[%c8_33, %c256_34], %56 {strides = array<i32>} : memref<72x512xf32, #tpu.memory_space<vmem>>, vector<4x256xf32>,
    %c15_i32_35 = arith.constant 15 : i32
    %58 = tpu.dynamic_rotate %47 by %c15_i32_35 dim 1 : vector<4x256xf32>, i32 -> vector<4x256xf32>
    %c2_36 = arith.constant 2 : index
    %c0_37 = arith.constant 0 : index
    %59 = vector.load %arg3[%c2_36, %c0_37] : memref<9x256xf32, #tpu.memory_space<vmem>>, vector<1x256xf32>
    %60 = vector.broadcast %59 : vector<1x256xf32> to vector<4x256xf32>
    %61 = arith.mulf %58, %60 : vector<4x256xf32>
    %c16_38 = arith.constant 16 : index
    %c256_39 = arith.constant 256 : index
    %62 = vector.load %arg6[%c16_38, %c256_39] : memref<72x512xf32, #tpu.memory_space<vmem>>, vector<4x256xf32>
    tpu.vector_store %arg6[%c16_38, %c256_39], %61 {strides = array<i32>} : memref<72x512xf32, #tpu.memory_space<vmem>>, vector<4x256xf32>,
    %c1_i32_40 = arith.constant 1 : i32
    %63 = tpu.dynamic_rotate %47 by %c1_i32_40 dim 1 : vector<4x256xf32>, i32 -> vector<4x256xf32>
    %c3_41 = arith.constant 3 : index
    %c0_42 = arith.constant 0 : index
    %64 = vector.load %arg3[%c3_41, %c0_42] : memref<9x256xf32, #tpu.memory_space<vmem>>, vector<1x256xf32>
    %65 = vector.broadcast %64 : vector<1x256xf32> to vector<4x256xf32>
    %66 = arith.mulf %63, %65 : vector<4x256xf32>
    %c24_43 = arith.constant 24 : index
    %c256_44 = arith.constant 256 : index
    %67 = vector.load %arg6[%c24_43, %c256_44] : memref<72x512xf32, #tpu.memory_space<vmem>>, vector<4x256xf32>
    tpu.vector_store %arg6[%c24_43, %c256_44], %66 {strides = array<i32>} : memref<72x512xf32, #tpu.memory_space<vmem>>, vector<4x256xf32>,
    %c32_45 = arith.constant 32 : index
    %c256_46 = arith.constant 256 : index
    %68 = vector.load %arg6[%c32_45, %c256_46] : memref<72x512xf32, #tpu.memory_space<vmem>>, vector<4x256xf32>
    tpu.vector_store %arg6[%c32_45, %c256_46], %47 {strides = array<i32>} : memref<72x512xf32, #tpu.memory_space<vmem>>, vector<4x256xf32>,
    %c255_i32_47 = arith.constant 255 : i32
    %69 = tpu.dynamic_rotate %47 by %c255_i32_47 dim 1 : vector<4x256xf32>, i32 -> vector<4x256xf32>
    %c5_48 = arith.constant 5 : index
    %c0_49 = arith.constant 0 : index
    %70 = vector.load %arg3[%c5_48, %c0_49] : memref<9x256xf32, #tpu.memory_space<vmem>>, vector<1x256xf32>
    %71 = vector.broadcast %70 : vector<1x256xf32> to vector<4x256xf32>
    %72 = arith.mulf %69, %71 : vector<4x256xf32>
    %c40_50 = arith.constant 40 : index
    %c256_51 = arith.constant 256 : index
    %73 = vector.load %arg6[%c40_50, %c256_51] : memref<72x512xf32, #tpu.memory_space<vmem>>, vector<4x256xf32>
    tpu.vector_store %arg6[%c40_50, %c256_51], %72 {strides = array<i32>} : memref<72x512xf32, #tpu.memory_space<vmem>>, vector<4x256xf32>,
    %c241_i32_52 = arith.constant 241 : i32
    %74 = tpu.dynamic_rotate %47 by %c241_i32_52 dim 1 : vector<4x256xf32>, i32 -> vector<4x256xf32>
    %c6_53 = arith.constant 6 : index
    %c0_54 = arith.constant 0 : index
    %75 = vector.load %arg3[%c6_53, %c0_54] : memref<9x256xf32, #tpu.memory_space<vmem>>, vector<1x256xf32>
    %76 = vector.broadcast %75 : vector<1x256xf32> to vector<4x256xf32>
    %77 = arith.mulf %74, %76 : vector<4x256xf32>
    %c48_55 = arith.constant 48 : index
    %c256_56 = arith.constant 256 : index
    %78 = vector.load %arg6[%c48_55, %c256_56] : memref<72x512xf32, #tpu.memory_space<vmem>>, vector<4x256xf32>
    tpu.vector_store %arg6[%c48_55, %c256_56], %77 {strides = array<i32>} : memref<72x512xf32, #tpu.memory_space<vmem>>, vector<4x256xf32>,
    %c240_i32_57 = arith.constant 240 : i32
    %79 = tpu.dynamic_rotate %47 by %c240_i32_57 dim 1 : vector<4x256xf32>, i32 -> vector<4x256xf32>
    %c7_58 = arith.constant 7 : index
    %c0_59 = arith.constant 0 : index
    %80 = vector.load %arg3[%c7_58, %c0_59] : memref<9x256xf32, #tpu.memory_space<vmem>>, vector<1x256xf32>
    %81 = vector.broadcast %80 : vector<1x256xf32> to vector<4x256xf32>
    %82 = arith.mulf %79, %81 : vector<4x256xf32>
    %c56_60 = arith.constant 56 : index
    %c256_61 = arith.constant 256 : index
    %83 = vector.load %arg6[%c56_60, %c256_61] : memref<72x512xf32, #tpu.memory_space<vmem>>, vector<4x256xf32>
    tpu.vector_store %arg6[%c56_60, %c256_61], %82 {strides = array<i32>} : memref<72x512xf32, #tpu.memory_space<vmem>>, vector<4x256xf32>,
    %c239_i32_62 = arith.constant 239 : i32
    %84 = tpu.dynamic_rotate %47 by %c239_i32_62 dim 1 : vector<4x256xf32>, i32 -> vector<4x256xf32>
    %c8_63 = arith.constant 8 : index
    %c0_64 = arith.constant 0 : index
    %85 = vector.load %arg3[%c8_63, %c0_64] : memref<9x256xf32, #tpu.memory_space<vmem>>, vector<1x256xf32>
    %86 = vector.broadcast %85 : vector<1x256xf32> to vector<4x256xf32>
    %87 = arith.mulf %84, %86 : vector<4x256xf32>
    %c64_65 = arith.constant 64 : index
    %c256_66 = arith.constant 256 : index
    %88 = vector.load %arg6[%c64_65, %c256_66] : memref<72x512xf32, #tpu.memory_space<vmem>>, vector<4x256xf32>
    tpu.vector_store %arg6[%c64_65, %c256_66], %87 {strides = array<i32>} : memref<72x512xf32, #tpu.memory_space<vmem>>, vector<4x256xf32>,
    %c0_67 = arith.constant 0 : index
    %c0_68 = arith.constant 0 : index
    %89 = vector.load %arg2[%c0_67, %c0_68] : memref<8x72xf32, #tpu.memory_space<vmem>>, vector<8x72xf32>
    %c0_69 = arith.constant 0 : index
    %c0_70 = arith.constant 0 : index
    %90 = vector.load %arg6[%c0_69, %c0_70] : memref<72x512xf32, #tpu.memory_space<vmem>>, vector<72x512xf32>
    %cst = arith.constant dense<0.000000e+00> : vector<8x512xf32>
    %91 = tpu.matmul %89, %90, %cst {dimension_numbers = #tpu.dot_dimension_numbers<[1], [0], [0], [1], [0, 0, 1, 1], [], []>} : vector<8x72xf32>, vector<72x512xf32>, vector<8x512xf32> -> vector<8x512xf32>
    %92 = vector.extract_strided_slice %91 {offsets = [0, 0], sizes = [8, 256], strides = [1, 1]} : vector<8x512xf32> to vector<8x256xf32>
    %93 = vector.extract_strided_slice %91 {offsets = [0, 256], sizes = [8, 256], strides = [1, 1]} : vector<8x512xf32> to vector<8x256xf32>
    %c0_i32_71 = arith.constant 0 : i32
    %94 = arith.cmpi eq, %arg0, %c0_i32_71 : i32
    %95 = arith.extui %94 : i1 to i32
    %c0_i32_72 = arith.constant 0 : i32
    %96 = arith.cmpi ne, %95, %c0_i32_72 : i32
    scf.if %96 {
      %c0_78 = arith.constant 0 : index
      %c0_79 = arith.constant 0 : index
      %103 = vector.load %arg4[%c0_78, %c0_79] : memref<8x1xf32, #tpu.memory_space<vmem>>, vector<8x1xf32>
      %104 = vector.broadcast %103 : vector<8x1xf32> to vector<8x256xf32>
      %105 = arith.addf %92, %104 : vector<8x256xf32>
      %c0_80 = arith.constant 0 : index
      %c0_81 = arith.constant 0 : index
      %c0_82 = arith.constant 0 : index
      %106 = vector.load %arg5[%c0_80, %c0_81, %c0_82] : memref<2x8x256xf32, #tpu.memory_space<vmem>>, vector<1x8x256xf32>
      %107 = vector.shape_cast %106 : vector<1x8x256xf32> to vector<8x256xf32>
      %108 = vector.shape_cast %105 : vector<8x256xf32> to vector<1x8x256xf32>
      tpu.vector_store %arg5[%c0_80, %c0_81, %c0_82], %108 {strides = array<i32>} : memref<2x8x256xf32, #tpu.memory_space<vmem>>, vector<1x8x256xf32>,
    } else {
    }
    %c0_i32_73 = arith.constant 0 : i32
    %97 = arith.cmpi ne, %arg0, %c0_i32_73 : i32
    %98 = arith.extui %97 : i1 to i32
    %c0_i32_74 = arith.constant 0 : i32
    %99 = arith.cmpi ne, %98, %c0_i32_74 : i32
    scf.if %99 {
      %c0_78 = arith.constant 0 : index
      %c0_79 = arith.constant 0 : index
      %c0_80 = arith.constant 0 : index
      %103 = vector.load %arg5[%c0_78, %c0_79, %c0_80] : memref<2x8x256xf32, #tpu.memory_space<vmem>>, vector<1x8x256xf32>
      %104 = vector.shape_cast %103 : vector<1x8x256xf32> to vector<8x256xf32>
      %105 = vector.shape_cast %92 : vector<8x256xf32> to vector<1x8x256xf32>
      tpu.vector_store %arg5[%c0_78, %c0_79, %c0_80], %105 {strides = array<i32>} : memref<2x8x256xf32, #tpu.memory_space<vmem>>, vector<1x8x256xf32>,
    } else {
    }
    %c1_75 = arith.constant 1 : index
    %c0_76 = arith.constant 0 : index
    %c0_77 = arith.constant 0 : index
    %100 = vector.load %arg5[%c1_75, %c0_76, %c0_77] : memref<2x8x256xf32, #tpu.memory_space<vmem>>, vector<1x8x256xf32>
    %101 = vector.shape_cast %100 : vector<1x8x256xf32> to vector<8x256xf32>
    %102 = vector.shape_cast %93 : vector<8x256xf32> to vector<1x8x256xf32>
    tpu.vector_store %arg5[%c1_75, %c0_76, %c0_77], %102 {strides = array<i32>} : memref<2x8x256xf32, #tpu.memory_space<vmem>>, vector<1x8x256xf32>,
    return
  }
  func.func @transform_0(%arg0: i32) -> (i32, i32, i32) {
    %c0_i32 = arith.constant 0 : i32
    %c0_i32_0 = arith.constant 0 : i32
    %c0_i32_1 = arith.constant 0 : i32
    return %arg0, %c0_i32, %c0_i32_0 : i32, i32, i32
  }
  func.func @transform_1(%arg0: i32) -> (i32, i32) {
    %c0_i32 = arith.constant 0 : i32
    %c0_i32_0 = arith.constant 0 : i32
    %c0_i32_1 = arith.constant 0 : i32
    return %c0_i32, %c0_i32_0 : i32, i32
  }
  func.func @transform_2(%arg0: i32) -> (i32, i32) {
    %c0_i32 = arith.constant 0 : i32
    %c0_i32_0 = arith.constant 0 : i32
    %c0_i32_1 = arith.constant 0 : i32
    return %c0_i32, %c0_i32_0 : i32, i32
  }
  func.func @transform_3(%arg0: i32) -> (i32, i32) {
    %c0_i32 = arith.constant 0 : i32
    %c0_i32_0 = arith.constant 0 : i32
    %c0_i32_1 = arith.constant 0 : i32
    return %c0_i32, %c0_i32_0 : i32, i32
  }
  func.func @transform_4(%arg0: i32) -> (i32, i32, i32) {
    %c0_i32 = arith.constant 0 : i32
    %c0_i32_0 = arith.constant 0 : i32
    %c0_i32_1 = arith.constant 0 : i32
    return %arg0, %c0_i32, %c0_i32_0 : i32, i32, i32
  }
}

</mosaic_0001>

<llo_original>
// kernel: tpu_custom_call.1
$region0: #{tpu_custom_call.1}
  #allocation0 [shape = 'u32[]', space=smem, size = 0x4, offset = 0x4, fixed_abs, tag = 'smem constant byte address 0x4 - core index']
  #allocation1 [shape = 'u32[144,128]{1,0:T(1,128)}', space=vmem, size = 0x12000, scoped, tag = 'internal scratch']
  #allocation2 [shape = 'f32[72,512]{1,0:T(8,128)}', space=vmem, size = 0x24000, scoped, tag = 'scratch operand']
  %s0 = inlined_call_operand.hbm [shape: f32[2,4,256], index: 0, kind: input, shape index: {}]
  %s1 = inlined_call_operand.vmem [shape: f32[8,72], index: 1, kind: input, shape index: {}]
  %s2 = inlined_call_operand.hbm [shape: f32[9,256], index: 2, kind: input, shape index: {}]
  %s3 = inlined_call_operand.vmem [shape: f32[8,1], index: 3, kind: input, shape index: {}]
  %s4 = inlined_call_operand.hbm [shape: f32[2,8,256], index: 4, kind: output, shape index: {}]
  %s5 = sld [smem:[#allocation0]]
  $region46: #{tpu_custom_call.1} parent=0
    _
  %s7 = ssub.s32 1, %s5
  %s8 = scalar_select 0, %s7, %s5
  $region1: #{tpu_custom_call.1} parent=0
    #allocation3 [shape = 'u8[8192]{0}', space=vmem, size = 0x2000, scoped, tag = 'input window, operand 0, single buffered']
    #allocation4 [shape = 's32[1]{0}', space=sflag, size = 0x4, scoped, tag = 'scoped memory for tpu_custom_call.1']
    #allocation5 [shape = 's32[1]{0}', space=sflag, size = 0x4, scoped, tag = 'scoped memory for tpu_custom_call.1']
    #allocation6 [shape = 'u8[16384]{0}', space=vmem, size = 0x4000, scoped, tag = 'input window, operand 2, single buffered']
    #allocation7 [shape = 's32[1]{0}', space=sflag, size = 0x4, scoped, tag = 'scoped memory for tpu_custom_call.1']
    #allocation8 [shape = 'u8[16384]{0}', space=vmem, size = 0x4000, scoped, tag = 'output window, operand 0, single buffered']
    %9 = vsyncpa [#allocation4], 0
    %10 = vsyncpa [#allocation7], 0
    %11 = vsyncpa [#allocation5], 0
    // Predicated region
    $region2: #{tpu_custom_call.1} parent=1 // pred_check
      _
    $region3: #{tpu_custom_call.1} parent=1 // pred_check_branch
      %13 = sbr.rel (0) target = $region5
    $region4: #{tpu_custom_call.1} parent=1 // pred_region
      %s15 = ssub.s32 256, 256
      %16 = vsyncadd [#allocation4], %s15
      %s17 = sshll.u32 [#allocation3], 4
      %s18 = int_to_ptr.vmem [resolvable:$true] %s17
      %23 = dma.hbm_to_vmem [thread:$0]  %s0, 256, %s18, [#allocation4], 128, 128, 8
    $region5: #{tpu_custom_call.1} parent=1 // pred_fallthru
      _
    // Predicated region
    $region6: #{tpu_custom_call.1} parent=1 // pred_check
      _
    $region7: #{tpu_custom_call.1} parent=1 // pred_check_branch
      %25 = sbr.rel (0) target = $region9
    $region8: #{tpu_custom_call.1} parent=1 // pred_region
      _
    $region9: #{tpu_custom_call.1} parent=1 // pred_fallthru
      _
    // Predicated region
    $region10: #{tpu_custom_call.1} parent=1 // pred_check
      _
    $region11: #{tpu_custom_call.1} parent=1 // pred_check_branch
      %27 = sbr.rel (0) target = $region13
    $region12: #{tpu_custom_call.1} parent=1 // pred_region
      %s29 = ssub.s32 512, 512
      %30 = vsyncadd [#allocation7], %s29
      %s31 = sshll.u32 [#allocation6], 4
      %s32 = int_to_ptr.vmem [resolvable:$true] %s31
      %37 = dma.hbm_to_vmem [thread:$0]  %s2, 512, %s32, [#allocation7], 256, 256, 16
    $region13: #{tpu_custom_call.1} parent=1 // pred_fallthru
      _
    // Predicated region
    $region14: #{tpu_custom_call.1} parent=1 // pred_check
      _
    $region15: #{tpu_custom_call.1} parent=1 // pred_check_branch
      %39 = sbr.rel (0) target = $region17
    $region16: #{tpu_custom_call.1} parent=1 // pred_region
      _
    $region17: #{tpu_custom_call.1} parent=1 // pred_fallthru
      _
    // Predicated region
    $region18: #{tpu_custom_call.1} parent=1 // pred_check
      _
    $region19: #{tpu_custom_call.1} parent=1 // pred_check_branch
      %41 = sbr.rel (0) target = $region21
    $region20: #{tpu_custom_call.1} parent=1 // pred_region
      %42 = dma.done [#allocation4], 256
    $region21: #{tpu_custom_call.1} parent=1 // pred_fallthru
      _
    // Predicated region
    $region22: #{tpu_custom_call.1} parent=1 // pred_check
      _
    $region23: #{tpu_custom_call.1} parent=1 // pred_check_branch
      %44 = sbr.rel (0) target = $region25
    $region24: #{tpu_custom_call.1} parent=1 // pred_region
      %45 = dma.done [#allocation7], 512
    $region25: #{tpu_custom_call.1} parent=1 // pred_fallthru
      _
    %p46 = scmp.eq.s32.totalorder 0, 0
    // Predicated region
    $region26: #{tpu_custom_call.1} parent=1 // pred_check
      %p47 = pneg %p46
    $region27: #{tpu_custom_call.1} parent=1 // pred_check_branch
      %49 = sbr.rel (%p47) target = $region29
    $region28: #{tpu_custom_call.1} parent=1 // pred_region
      %50 = vst [vmem:[#allocation2] sm:$0xf0] 0.0
      %51 = vst [vmem:[#allocation2 + $0x8] sm:$0xf0] 0.0
      %52 = vst [vmem:[#allocation2 + $0x10] sm:$0xf0] 0.0
      %53 = vst [vmem:[#allocation2 + $0x18] sm:$0xf0] 0.0
      %54 = vst [vmem:[#allocation2 + $0x20] sm:$0xf0] 0.0
      %55 = vst [vmem:[#allocation2 + $0x28] sm:$0xf0] 0.0
      %56 = vst [vmem:[#allocation2 + $0x30] sm:$0xf0] 0.0
      %57 = vst [vmem:[#allocation2 + $0x38] sm:$0xf0] 0.0
      %58 = vst [vmem:[#allocation2 + $0x40] sm:$0xf0] 0.0
      %59 = vst [vmem:[#allocation2 + $0x48] sm:$0xf0] 0.0
      %60 = vst [vmem:[#allocation2 + $0x50] sm:$0xf0] 0.0
      %61 = vst [vmem:[#allocation2 + $0x58] sm:$0xf0] 0.0
      %62 = vst [vmem:[#allocation2 + $0x60] sm:$0xf0] 0.0
      %63 = vst [vmem:[#allocation2 + $0x68] sm:$0xf0] 0.0
      %64 = vst [vmem:[#allocation2 + $0x70] sm:$0xf0] 0.0
      %65 = vst [vmem:[#allocation2 + $0x78] sm:$0xf0] 0.0
      %66 = vst [vmem:[#allocation2 + $0x80] sm:$0xf0] 0.0
      %67 = vst [vmem:[#allocation2 + $0x88] sm:$0xf0] 0.0
      %68 = vst [vmem:[#allocation2 + $0x90] sm:$0xf0] 0.0
      %69 = vst [vmem:[#allocation2 + $0x98] sm:$0xf0] 0.0
      %70 = vst [vmem:[#allocation2 + $0xa0] sm:$0xf0] 0.0
      %71 = vst [vmem:[#allocation2 + $0xa8] sm:$0xf0] 0.0
      %72 = vst [vmem:[#allocation2 + $0xb0] sm:$0xf0] 0.0
      %73 = vst [vmem:[#allocation2 + $0xb8] sm:$0xf0] 0.0
      %74 = vst [vmem:[#allocation2 + $0xc0] sm:$0xf0] 0.0
      %75 = vst [vmem:[#allocation2 + $0xc8] sm:$0xf0] 0.0
      %76 = vst [vmem:[#allocation2 + $0xd0] sm:$0xf0] 0.0
      %77 = vst [vmem:[#allocation2 + $0xd8] sm:$0xf0] 0.0
      %78 = vst [vmem:[#allocation2 + $0xe0] sm:$0xf0] 0.0
      %79 = vst [vmem:[#allocation2 + $0xe8] sm:$0xf0] 0.0
      %80 = vst [vmem:[#allocation2 + $0xf0] sm:$0xf0] 0.0
      %81 = vst [vmem:[#allocation2 + $0xf8] sm:$0xf0] 0.0
      %82 = vst [vmem:[#allocation2 + $0x100] sm:$0xf0] 0.0
      %83 = vst [vmem:[#allocation2 + $0x108] sm:$0xf0] 0.0
      %84 = vst [vmem:[#allocation2 + $0x110] sm:$0xf0] 0.0
      %85 = vst [vmem:[#allocation2 + $0x118] sm:$0xf0] 0.0
    $region29: #{tpu_custom_call.1} parent=1 // pred_fallthru
      _
    %v86 = vld [vmem:[#allocation3] sm:$0xff]
    %v88 = vcombine.high %v86, %v86
    %90 = vrot.lane.b32.xlu0 %v86, 17
    %v91 = vpop.permute.xlu0 %90
    %92 = vrot.lane.b32.xlu0 %v88, 17
    %v93 = vpop.permute.xlu0 %92
    %v94 = vlaneseq
    %v95 = vand.u32 %v94, 127
    %vm96 = vcmp.lt.s32.totalorder %v95, 17
    %v97 = vsel %vm96, %v91, %v93
    %v98 = vsel %vm96, %v93, %v91
    %v99 = vld [vmem:[#allocation6] ss:$8 sm:$0x3]
    %v101 = vlaneseq
    %v102 = vshrl.u32 %v101, 7
    %v103 = vsub.s32 0, %v102
    %v104 = vrot.slane %v99, %v103
    %v105 = vlaneseq
    %v106 = vshrl.u32 %v105, 7
    %v107 = vsub.s32 1, %v106
    %v108 = vrot.slane %v99, %v107
    %v111 = vmul.f32 %v98, %v104
    %v112 = vmul.f32 %v97, %v108
    %113 = vst [vmem:[#allocation2] sm:$0xf] %v111
    %114 = vst [vmem:[#allocation2 + $0x8] sm:$0xf] %v112
    %115 = vrot.lane.b32.xlu0 %v86, 16
    %v116 = vpop.permute.xlu0 %115
    %117 = vrot.lane.b32.xlu0 %v88, 16
    %v118 = vpop.permute.xlu0 %117
    %vm119 = vcmp.lt.s32.totalorder %v95, 16
    %v120 = vsel %vm119, %v116, %v118
    %v121 = vsel %vm119, %v118, %v116
    %s122 = scalar_lea.vmem [#allocation6], 1
    %v123 = vld [vmem:[%s122] ss:$8 sm:$0x3]
    %v125 = vlaneseq
    %v126 = vshrl.u32 %v125, 7
    %v127 = vsub.s32 0, %v126
    %v128 = vrot.slane %v123, %v127
    %v129 = vlaneseq
    %v130 = vshrl.u32 %v129, 7
    %v131 = vsub.s32 1, %v130
    %v132 = vrot.slane %v123, %v131
    %v135 = vmul.f32 %v121, %v128
    %v136 = vmul.f32 %v120, %v132
    %137 = vst [vmem:[#allocation2 + $0x20] sm:$0xf] %v135
    %138 = vst [vmem:[#allocation2 + $0x28] sm:$0xf] %v136
    %139 = vrot.lane.b32.xlu0 %v86, 15
    %v140 = vpop.permute.xlu0 %139
    %141 = vrot.lane.b32.xlu0 %v88, 15
    %v142 = vpop.permute.xlu0 %141
    %vm143 = vcmp.lt.s32.totalorder %v95, 15
    %v144 = vsel %vm143, %v140, %v142
    %v145 = vsel %vm143, %v142, %v140
    %s146 = scalar_lea.vmem [#allocation6], 2
    %v147 = vld [vmem:[%s146] ss:$8 sm:$0x3]
    %v149 = vlaneseq
    %v150 = vshrl.u32 %v149, 7
    %v151 = vsub.s32 0, %v150
    %v152 = vrot.slane %v147, %v151
    %v153 = vlaneseq
    %v154 = vshrl.u32 %v153, 7
    %v155 = vsub.s32 1, %v154
    %v156 = vrot.slane %v147, %v155
    %v159 = vmul.f32 %v145, %v152
    %v160 = vmul.f32 %v144, %v156
    %161 = vst [vmem:[#allocation2 + $0x40] sm:$0xf] %v159
    %162 = vst [vmem:[#allocation2 + $0x48] sm:$0xf] %v160
    %163 = vrot.lane.b32.xlu0 %v86, 1
    %v164 = vpop.permute.xlu0 %163
    %165 = vrot.lane.b32.xlu0 %v88, 1
    %v166 = vpop.permute.xlu0 %165
    %vm167 = vcmp.lt.s32.totalorder %v95, 1
    %v168 = vsel %vm167, %v164, %v166
    %v169 = vsel %vm167, %v166, %v164
    %s170 = scalar_lea.vmem [#allocation6], 3
    %v171 = vld [vmem:[%s170] ss:$8 sm:$0x3]
    %v173 = vlaneseq
    %v174 = vshrl.u32 %v173, 7
    %v175 = vsub.s32 0, %v174
    %v176 = vrot.slane %v171, %v175
    %v177 = vlaneseq
    %v178 = vshrl.u32 %v177, 7
    %v179 = vsub.s32 1, %v178
    %v180 = vrot.slane %v171, %v179
    %v183 = vmul.f32 %v169, %v176
    %v184 = vmul.f32 %v168, %v180
    %185 = vst [vmem:[#allocation2 + $0x60] sm:$0xf] %v183
    %186 = vst [vmem:[#allocation2 + $0x68] sm:$0xf] %v184
    %187 = vst [vmem:[#allocation2 + $0x80] sm:$0xf] %v86
    %188 = vst [vmem:[#allocation2 + $0x88] sm:$0xf] %v88
    %189 = vrot.lane.b32.xlu0 %v86, 127
    %v190 = vpop.permute.xlu0 %189
    %191 = vrot.lane.b32.xlu0 %v88, 127
    %v192 = vpop.permute.xlu0 %191
    %vm193 = vcmp.lt.s32.totalorder %v95, 127
    %v194 = vsel %vm193, %v190, %v192
    %v195 = vsel %vm193, %v192, %v190
    %s196 = scalar_lea.vmem [#allocation6], 5
    %v197 = vld [vmem:[%s196] ss:$8 sm:$0x3]
    %v199 = vlaneseq
    %v200 = vshrl.u32 %v199, 7
    %v201 = vsub.s32 0, %v200
    %v202 = vrot.slane %v197, %v201
    %v203 = vlaneseq
    %v204 = vshrl.u32 %v203, 7
    %v205 = vsub.s32 1, %v204
    %v206 = vrot.slane %v197, %v205
    %v209 = vmul.f32 %v194, %v202
    %v210 = vmul.f32 %v195, %v206
    %211 = vst [vmem:[#allocation2 + $0xa0] sm:$0xf] %v209
    %212 = vst [vmem:[#allocation2 + $0xa8] sm:$0xf] %v210
    %213 = vrot.lane.b32.xlu0 %v86, 113
    %v214 = vpop.permute.xlu0 %213
    %215 = vrot.lane.b32.xlu0 %v88, 113
    %v216 = vpop.permute.xlu0 %215
    %vm217 = vcmp.lt.s32.totalorder %v95, 113
    %v218 = vsel %vm217, %v214, %v216
    %v219 = vsel %vm217, %v216, %v214
    %s220 = scalar_lea.vmem [#allocation6], 6
    %v221 = vld [vmem:[%s220] ss:$8 sm:$0x3]
    %v223 = vlaneseq
    %v224 = vshrl.u32 %v223, 7
    %v225 = vsub.s32 0, %v224
    %v226 = vrot.slane %v221, %v225
    %v227 = vlaneseq
    %v228 = vshrl.u32 %v227, 7
    %v229 = vsub.s32 1, %v228
    %v230 = vrot.slane %v221, %v229
    %v233 = vmul.f32 %v218, %v226
    %v234 = vmul.f32 %v219, %v230
    %235 = vst [vmem:[#allocation2 + $0xc0] sm:$0xf] %v233
    %236 = vst [vmem:[#allocation2 + $0xc8] sm:$0xf] %v234
    %237 = vrot.lane.b32.xlu0 %v86, 112
    %v238 = vpop.permute.xlu0 %237
    %239 = vrot.lane.b32.xlu0 %v88, 112
    %v240 = vpop.permute.xlu0 %239
    %vm241 = vcmp.lt.s32.totalorder %v95, 112
    %v242 = vsel %vm241, %v238, %v240
    %v243 = vsel %vm241, %v240, %v238
    %s244 = scalar_lea.vmem [#allocation6], 7
    %v245 = vld [vmem:[%s244] ss:$8 sm:$0x3]
    %v247 = vlaneseq
    %v248 = vshrl.u32 %v247, 7
    %v249 = vsub.s32 0, %v248
    %v250 = vrot.slane %v245, %v249
    %v251 = vlaneseq
    %v252 = vshrl.u32 %v251, 7
    %v253 = vsub.s32 1, %v252
    %v254 = vrot.slane %v245, %v253
    %v257 = vmul.f32 %v242, %v250
    %v258 = vmul.f32 %v243, %v254
    %259 = vst [vmem:[#allocation2 + $0xe0] sm:$0xf] %v257
    %260 = vst [vmem:[#allocation2 + $0xe8] sm:$0xf] %v258
    %261 = vrot.lane.b32.xlu0 %v86, 111
    %v262 = vpop.permute.xlu0 %261
    %263 = vrot.lane.b32.xlu0 %v88, 111
    %v264 = vpop.permute.xlu0 %263
    %vm265 = vcmp.lt.s32.totalorder %v95, 111
    %v266 = vsel %vm265, %v262, %v264
    %v267 = vsel %vm265, %v264, %v262
    %s268 = scalar_lea.vmem [#allocation6], 16
    %v269 = vld [vmem:[%s268] ss:$8 sm:$0x3]
    %v271 = vlaneseq
    %v272 = vshrl.u32 %v271, 7
    %v273 = vsub.s32 0, %v272
    %v274 = vrot.slane %v269, %v273
    %v275 = vlaneseq
    %v276 = vshrl.u32 %v275, 7
    %v277 = vsub.s32 1, %v276
    %v278 = vrot.slane %v269, %v277
    %v281 = vmul.f32 %v266, %v274
    %v282 = vmul.f32 %v267, %v278
    %283 = vst [vmem:[#allocation2 + $0x100] sm:$0xf] %v281
    %284 = vst [vmem:[#allocation2 + $0x108] sm:$0xf] %v282
    %s285 = scalar_lea.vmem [#allocation3], 8
    %v286 = vld [vmem:[%s285] sm:$0xff]
    %v288 = vcombine.high %v286, %v286
    %290 = vrot.lane.b32.xlu0 %v286, 17
    %v291 = vpop.permute.xlu0 %290
    %292 = vrot.lane.b32.xlu0 %v288, 17
    %v293 = vpop.permute.xlu0 %292
    %v294 = vsel %vm96, %v291, %v293
    %v295 = vsel %vm96, %v293, %v291
    %v296 = vld [vmem:[#allocation6] ss:$8 sm:$0x3]
    %v298 = vlaneseq
    %v299 = vshrl.u32 %v298, 7
    %v300 = vsub.s32 0, %v299
    %v301 = vrot.slane %v296, %v300
    %v302 = vlaneseq
    %v303 = vshrl.u32 %v302, 7
    %v304 = vsub.s32 1, %v303
    %v305 = vrot.slane %v296, %v304
    %v308 = vmul.f32 %v295, %v301
    %v309 = vmul.f32 %v294, %v305
    %310 = vst [vmem:[#allocation2 + $0x10] sm:$0xf] %v308
    %311 = vst [vmem:[#allocation2 + $0x18] sm:$0xf] %v309
    %312 = vrot.lane.b32.xlu0 %v286, 16
    %v313 = vpop.permute.xlu0 %312
    %314 = vrot.lane.b32.xlu0 %v288, 16
    %v315 = vpop.permute.xlu0 %314
    %v316 = vsel %vm119, %v313, %v315
    %v317 = vsel %vm119, %v315, %v313
    %v318 = vld [vmem:[%s122] ss:$8 sm:$0x3]
    %v320 = vlaneseq
    %v321 = vshrl.u32 %v320, 7
    %v322 = vsub.s32 0, %v321
    %v323 = vrot.slane %v318, %v322
    %v324 = vlaneseq
    %v325 = vshrl.u32 %v324, 7
    %v326 = vsub.s32 1, %v325
    %v327 = vrot.slane %v318, %v326
    %v330 = vmul.f32 %v317, %v323
    %v331 = vmul.f32 %v316, %v327
    %332 = vst [vmem:[#allocation2 + $0x30] sm:$0xf] %v330
    %333 = vst [vmem:[#allocation2 + $0x38] sm:$0xf] %v331
    %334 = vrot.lane.b32.xlu0 %v286, 15
    %v335 = vpop.permute.xlu0 %334
    %336 = vrot.lane.b32.xlu0 %v288, 15
    %v337 = vpop.permute.xlu0 %336
    %v338 = vsel %vm143, %v335, %v337
    %v339 = vsel %vm143, %v337, %v335
    %v340 = vld [vmem:[%s146] ss:$8 sm:$0x3]
    %v342 = vlaneseq
    %v343 = vshrl.u32 %v342, 7
    %v344 = vsub.s32 0, %v343
    %v345 = vrot.slane %v340, %v344
    %v346 = vlaneseq
    %v347 = vshrl.u32 %v346, 7
    %v348 = vsub.s32 1, %v347
    %v349 = vrot.slane %v340, %v348
    %v352 = vmul.f32 %v339, %v345
    %v353 = vmul.f32 %v338, %v349
    %354 = vst [vmem:[#allocation2 + $0x50] sm:$0xf] %v352
    %355 = vst [vmem:[#allocation2 + $0x58] sm:$0xf] %v353
    %356 = vrot.lane.b32.xlu0 %v286, 1
    %v357 = vpop.permute.xlu0 %356
    %358 = vrot.lane.b32.xlu0 %v288, 1
    %v359 = vpop.permute.xlu0 %358
    %v360 = vsel %vm167, %v357, %v359
    %v361 = vsel %vm167, %v359, %v357
    %v362 = vld [vmem:[%s170] ss:$8 sm:$0x3]
    %v364 = vlaneseq
    %v365 = vshrl.u32 %v364, 7
    %v366 = vsub.s32 0, %v365
    %v367 = vrot.slane %v362, %v366
    %v368 = vlaneseq
    %v369 = vshrl.u32 %v368, 7
    %v370 = vsub.s32 1, %v369
    %v371 = vrot.slane %v362, %v370
    %v374 = vmul.f32 %v361, %v367
    %v375 = vmul.f32 %v360, %v371
    %376 = vst [vmem:[#allocation2 + $0x70] sm:$0xf] %v374
    %377 = vst [vmem:[#allocation2 + $0x78] sm:$0xf] %v375
    %378 = vst [vmem:[#allocation2 + $0x90] sm:$0xf] %v286
    %379 = vst [vmem:[#allocation2 + $0x98] sm:$0xf] %v288
    %380 = vrot.lane.b32.xlu0 %v286, 127
    %v381 = vpop.permute.xlu0 %380
    %382 = vrot.lane.b32.xlu0 %v288, 127
    %v383 = vpop.permute.xlu0 %382
    %v384 = vsel %vm193, %v381, %v383
    %v385 = vsel %vm193, %v383, %v381
    %v386 = vld [vmem:[%s196] ss:$8 sm:$0x3]
    %v388 = vlaneseq
    %v389 = vshrl.u32 %v388, 7
    %v390 = vsub.s32 0, %v389
    %v391 = vrot.slane %v386, %v390
    %v392 = vlaneseq
    %v393 = vshrl.u32 %v392, 7
    %v394 = vsub.s32 1, %v393
    %v395 = vrot.slane %v386, %v394
    %v398 = vmul.f32 %v384, %v391
    %v399 = vmul.f32 %v385, %v395
    %400 = vst [vmem:[#allocation2 + $0xb0] sm:$0xf] %v398
    %401 = vst [vmem:[#allocation2 + $0xb8] sm:$0xf] %v399
    %402 = vrot.lane.b32.xlu0 %v286, 113
    %v403 = vpop.permute.xlu0 %402
    %404 = vrot.lane.b32.xlu0 %v288, 113
    %v405 = vpop.permute.xlu0 %404
    %v406 = vsel %vm217, %v403, %v405
    %v407 = vsel %vm217, %v405, %v403
    %v408 = vld [vmem:[%s220] ss:$8 sm:$0x3]
    %v410 = vlaneseq
    %v411 = vshrl.u32 %v410, 7
    %v412 = vsub.s32 0, %v411
    %v413 = vrot.slane %v408, %v412
    %v414 = vlaneseq
    %v415 = vshrl.u32 %v414, 7
    %v416 = vsub.s32 1, %v415
    %v417 = vrot.slane %v408, %v416
    %v420 = vmul.f32 %v406, %v413
    %v421 = vmul.f32 %v407, %v417
    %422 = vst [vmem:[#allocation2 + $0xd0] sm:$0xf] %v420
    %423 = vst [vmem:[#allocation2 + $0xd8] sm:$0xf] %v421
    %424 = vrot.lane.b32.xlu0 %v286, 112
    %v425 = vpop.permute.xlu0 %424
    %426 = vrot.lane.b32.xlu0 %v288, 112
    %v427 = vpop.permute.xlu0 %426
    %v428 = vsel %vm241, %v425, %v427
    %v429 = vsel %vm241, %v427, %v425
    %v430 = vld [vmem:[%s244] ss:$8 sm:$0x3]
    %v432 = vlaneseq
    %v433 = vshrl.u32 %v432, 7
    %v434 = vsub.s32 0, %v433
    %v435 = vrot.slane %v430, %v434
    %v436 = vlaneseq
    %v437 = vshrl.u32 %v436, 7
    %v438 = vsub.s32 1, %v437
    %v439 = vrot.slane %v430, %v438
    %v442 = vmul.f32 %v428, %v435
    %v443 = vmul.f32 %v429, %v439
    %444 = vst [vmem:[#allocation2 + $0xf0] sm:$0xf] %v442
    %445 = vst [vmem:[#allocation2 + $0xf8] sm:$0xf] %v443
    %446 = vrot.lane.b32.xlu0 %v286, 111
    %v447 = vpop.permute.xlu0 %446
    %448 = vrot.lane.b32.xlu0 %v288, 111
    %v449 = vpop.permute.xlu0 %448
    %v450 = vsel %vm265, %v447, %v449
    %v451 = vsel %vm265, %v449, %v447
    %v452 = vld [vmem:[%s268] ss:$8 sm:$0x3]
    %v454 = vlaneseq
    %v455 = vshrl.u32 %v454, 7
    %v456 = vsub.s32 0, %v455
    %v457 = vrot.slane %v452, %v456
    %v458 = vlaneseq
    %v459 = vshrl.u32 %v458, 7
    %v460 = vsub.s32 1, %v459
    %v461 = vrot.slane %v452, %v460
    %v464 = vmul.f32 %v450, %v457
    %v465 = vmul.f32 %v451, %v461
    %466 = vst [vmem:[#allocation2 + $0x110] sm:$0xf] %v464
    %467 = vst [vmem:[#allocation2 + $0x118] sm:$0xf] %v465
    %v468 = vld [vmem:[%s1] sm:$0xff]
    %v469 = vld [vmem:[#allocation2] sm:$0xff]
    %v470 = vld [vmem:[#allocation2 + $0x8] sm:$0xff]
    %v471 = vld [vmem:[#allocation2 + $0x10] sm:$0xff]
    %v472 = vld [vmem:[#allocation2 + $0x18] sm:$0xff]
    %v473 = vld [vmem:[#allocation2 + $0x20] sm:$0xff]
    %v474 = vld [vmem:[#allocation2 + $0x28] sm:$0xff]
    %v475 = vld [vmem:[#allocation2 + $0x30] sm:$0xff]
    %v476 = vld [vmem:[#allocation2 + $0x38] sm:$0xff]
    %v477 = vld [vmem:[#allocation2 + $0x40] sm:$0xff]
    %v478 = vld [vmem:[#allocation2 + $0x48] sm:$0xff]
    %v479 = vld [vmem:[#allocation2 + $0x50] sm:$0xff]
    %v480 = vld [vmem:[#allocation2 + $0x58] sm:$0xff]
    %v481 = vld [vmem:[#allocation2 + $0x60] sm:$0xff]
    %v482 = vld [vmem:[#allocation2 + $0x68] sm:$0xff]
    %v483 = vld [vmem:[#allocation2 + $0x70] sm:$0xff]
    %v484 = vld [vmem:[#allocation2 + $0x78] sm:$0xff]
    %v485 = vld [vmem:[#allocation2 + $0x80] sm:$0xff]
    %v486 = vld [vmem:[#allocation2 + $0x88] sm:$0xff]
    %v487 = vld [vmem:[#allocation2 + $0x90] sm:$0xff]
    %v488 = vld [vmem:[#allocation2 + $0x98] sm:$0xff]
    %v489 = vld [vmem:[#allocation2 + $0xa0] sm:$0xff]
    %v490 = vld [vmem:[#allocation2 + $0xa8] sm:$0xff]
    %v491 = vld [vmem:[#allocation2 + $0xb0] sm:$0xff]
    %v492 = vld [vmem:[#allocation2 + $0xb8] sm:$0xff]
    %v493 = vld [vmem:[#allocation2 + $0xc0] sm:$0xff]
    %v494 = vld [vmem:[#allocation2 + $0xc8] sm:$0xff]
    %v495 = vld [vmem:[#allocation2 + $0xd0] sm:$0xff]
    %v496 = vld [vmem:[#allocation2 + $0xd8] sm:$0xff]
    %v497 = vld [vmem:[#allocation2 + $0xe0] sm:$0xff]
    %v498 = vld [vmem:[#allocation2 + $0xe8] sm:$0xff]
    %v499 = vld [vmem:[#allocation2 + $0xf0] sm:$0xff]
    %v500 = vld [vmem:[#allocation2 + $0xf8] sm:$0xff]
    %v501 = vld [vmem:[#allocation2 + $0x100] sm:$0xff]
    %v502 = vld [vmem:[#allocation2 + $0x108] sm:$0xff]
    %v503 = vld [vmem:[#allocation2 + $0x110] sm:$0xff]
    %v504 = vld [vmem:[#allocation2 + $0x118] sm:$0xff]
    %vm505 = vcmask 588800
    %v507 = vsel %vm505, %v468, 0
    %509 = vmatprep.subr.mxu0 %v470
    %510 = vmatpush1.msra.mxu0 %v469
    %511 = vmatprep.subr.mxu0 %v474
    %512 = vmatpush1.msra.mxu0 %v473
    %513 = vmatprep.subr.mxu0 %v478
    %514 = vmatpush1.msra.mxu0 %v477
    %515 = vmatprep.subr.mxu0 %v482
    %516 = vmatpush1.msra.mxu0 %v481
    %517 = vmatprep.subr.mxu0 %v486
    %518 = vmatpush1.msra.mxu0 %v485
    %519 = vmatprep.subr.mxu0 %v490
    %520 = vmatpush1.msra.mxu0 %v489
    %521 = vmatprep.subr.mxu0 %v494
    %522 = vmatpush1.msra.mxu0 %v493
    %523 = vmatprep.subr.mxu0 %v498
    %524 = vmatpush1.msra.mxu0 %v497
    %525 = vmatprep.subr.mxu0 %v502
    %526 = vmatpush1.msra.mxu0 %v501
    %527 = vmatprep.subr.mxu0 0.0
    %528 = vmatpush1.msra.mxu0 0.0
    %529 = vmatprep.subr.mxu0 0.0
    %530 = vmatpush1.msra.mxu0 0.0
    %531 = vmatprep.subr.mxu0 0.0
    %532 = vmatpush1.msra.mxu0 0.0
    %533 = vmatprep.subr.mxu0 0.0
    %534 = vmatpush1.msra.mxu0 0.0
    %535 = vmatprep.subr.mxu0 0.0
    %536 = vmatpush1.msra.mxu0 0.0
    %537 = vmatprep.subr.mxu0 0.0
    %538 = vmatpush1.msra.mxu0 0.0
    %539 = vmatprep.subr.mxu0 0.0
    %540 = vmatpush1.msra.mxu0 0.0
    %541 = vmatprep.subr.mxu0 0.0
    %542 = vmatpush1.msra.mxu0 0.0
    %543 = vmatprep.subr.mxu0 0.0
    %544 = vmatpush1.msra.mxu0 0.0
    %545 = vmatprep.subr.mxu0 0.0
    %546 = vmatpush1.msra.mxu0 0.0
    %547 = vmatprep.subr.mxu0 0.0
    %548 = vmatpush1.msra.mxu0 0.0
    %549 = vmatprep.subr.mxu0 0.0
    %550 = vmatpush1.msra.mxu0 0.0
    %551 = vmatprep.subr.mxu0 0.0
    %552 = vmatpush1.msra.mxu0 0.0
    %553 = vmatprep.subr.mxu0 0.0
    %554 = vmatpush1.msra.mxu0 0.0
    %555 = vmatprep.subr.mxu0 0.0
    %556 = vmatpush1.msra.mxu0 0.0
    %557 = vmatprep.subr.mxu0 0.0
    %558 = vmatpush1.msra.mxu0 0.0
    %559 = vmatprep.subr.mxu0 0.0
    %560 = vmatpush1.msra.mxu0 0.0
    %561 = vmatprep.subr.mxu0 0.0
    %562 = vmatpush1.msra.mxu0 0.0
    %563 = vmatprep.subr.mxu0 0.0
    %564 = vmatpush1.msra.mxu0 0.0
    %565 = vmatprep.subr.mxu0 0.0
    %566 = vmatpush1.msra.mxu0 0.0
    %567 = vmatprep.subr.mxu0 0.0
    %568 = vmatpush1.msra.mxu0 0.0
    %569 = vmatprep.subr.mxu0 0.0
    %570 = vmatpush1.msra.mxu0 0.0
    %571 = vmatprep.subr.mxu0 0.0
    %572 = vmatpush1.msra.mxu0 0.0
    %573 = vmatprep.mubr.f32.mxu0 0.0
    %574 = vmatmul.mubr.f32.gmra.mrb[0].mxu0 %v507
    %v575 = vpop.f32.mrb[0].mxu0
    %v576 = vadd.f32 0.0, %v575
    %v577 = vpop.f32.mrb[0].mxu0
    %v578 = vadd.f32 0.0, %v577
    %579 = vdwg.mxu0
    %580 = vmatprep.subr.mxu0 %v472
    %581 = vmatpush1.msra.mxu0 %v471
    %582 = vmatprep.subr.mxu0 %v476
    %583 = vmatpush1.msra.mxu0 %v475
    %584 = vmatprep.subr.mxu0 %v480
    %585 = vmatpush1.msra.mxu0 %v479
    %586 = vmatprep.subr.mxu0 %v484
    %587 = vmatpush1.msra.mxu0 %v483
    %588 = vmatprep.subr.mxu0 %v488
    %589 = vmatpush1.msra.mxu0 %v487
    %590 = vmatprep.subr.mxu0 %v492
    %591 = vmatpush1.msra.mxu0 %v491
    %592 = vmatprep.subr.mxu0 %v496
    %593 = vmatpush1.msra.mxu0 %v495
    %594 = vmatprep.subr.mxu0 %v500
    %595 = vmatpush1.msra.mxu0 %v499
    %596 = vmatprep.subr.mxu0 %v504
    %597 = vmatpush1.msra.mxu0 %v503
    %598 = vmatprep.subr.mxu0 0.0
    %599 = vmatpush1.msra.mxu0 0.0
    %600 = vmatprep.subr.mxu0 0.0
    %601 = vmatpush1.msra.mxu0 0.0
    %602 = vmatprep.subr.mxu0 0.0
    %603 = vmatpush1.msra.mxu0 0.0
    %604 = vmatprep.subr.mxu0 0.0
    %605 = vmatpush1.msra.mxu0 0.0
    %606 = vmatprep.subr.mxu0 0.0
    %607 = vmatpush1.msra.mxu0 0.0
    %608 = vmatprep.subr.mxu0 0.0
    %609 = vmatpush1.msra.mxu0 0.0
    %610 = vmatprep.subr.mxu0 0.0
    %611 = vmatpush1.msra.mxu0 0.0
    %612 = vmatprep.subr.mxu0 0.0
    %613 = vmatpush1.msra.mxu0 0.0
    %614 = vmatprep.subr.mxu0 0.0
    %615 = vmatpush1.msra.mxu0 0.0
    %616 = vmatprep.subr.mxu0 0.0
    %617 = vmatpush1.msra.mxu0 0.0
    %618 = vmatprep.subr.mxu0 0.0
    %619 = vmatpush1.msra.mxu0 0.0
    %620 = vmatprep.subr.mxu0 0.0
    %621 = vmatpush1.msra.mxu0 0.0
    %622 = vmatprep.subr.mxu0 0.0
    %623 = vmatpush1.msra.mxu0 0.0
    %624 = vmatprep.subr.mxu0 0.0
    %625 = vmatpush1.msra.mxu0 0.0
    %626 = vmatprep.subr.mxu0 0.0
    %627 = vmatpush1.msra.mxu0 0.0
    %628 = vmatprep.subr.mxu0 0.0
    %629 = vmatpush1.msra.mxu0 0.0
    %630 = vmatprep.subr.mxu0 0.0
    %631 = vmatpush1.msra.mxu0 0.0
    %632 = vmatprep.subr.mxu0 0.0
    %633 = vmatpush1.msra.mxu0 0.0
    %634 = vmatprep.subr.mxu0 0.0
    %635 = vmatpush1.msra.mxu0 0.0
    %636 = vmatprep.subr.mxu0 0.0
    %637 = vmatpush1.msra.mxu0 0.0
    %638 = vmatprep.subr.mxu0 0.0
    %639 = vmatpush1.msra.mxu0 0.0
    %640 = vmatprep.subr.mxu0 0.0
    %641 = vmatpush1.msra.mxu0 0.0
    %642 = vmatprep.subr.mxu0 0.0
    %643 = vmatpush1.msra.mxu0 0.0
    %644 = vmatprep.mubr.f32.mxu0 0.0
    %645 = vmatmul.mubr.f32.gmra.mrb[0].mxu0 %v507
    %v646 = vpop.f32.mrb[0].mxu0
    %v647 = vadd.f32 0.0, %v646
    %v648 = vpop.f32.mrb[0].mxu0
    %v649 = vadd.f32 0.0, %v648
    %650 = vdwg.mxu0
    // Predicated region
    $region30: #{tpu_custom_call.1} parent=1 // pred_check
      %p651 = pneg %p46
    $region31: #{tpu_custom_call.1} parent=1 // pred_check_branch
      %653 = sbr.rel (%p651) target = $region33
    $region32: #{tpu_custom_call.1} parent=1 // pred_region
      %v654 = vld [vmem:[%s3] sm:$0xff]
      %656 = vset.pattern.permute.xlu0 0
      %657 = vperm.xlu0 %656, %v654
      %v658 = vpop.permute.xlu0 %657
      %v660 = vadd.f32 %v576, %v658
      %v661 = vadd.f32 %v578, %v658
      %662 = vst [vmem:[#allocation8] sm:$0xff] %v660
      %663 = vst [vmem:[#allocation8 + $0x8] sm:$0xff] %v661
    $region33: #{tpu_custom_call.1} parent=1 // pred_fallthru
      _
    %p664 = scmp.ne.s32.totalorder 0, 0
    // Predicated region
    $region34: #{tpu_custom_call.1} parent=1 // pred_check
      %p665 = pneg %p664
    $region35: #{tpu_custom_call.1} parent=1 // pred_check_branch
      %667 = sbr.rel (%p665) target = $region37
    $region36: #{tpu_custom_call.1} parent=1 // pred_region
      %668 = vst [vmem:[#allocation8] sm:$0xff] %v576
      %669 = vst [vmem:[#allocation8 + $0x8] sm:$0xff] %v578
    $region37: #{tpu_custom_call.1} parent=1 // pred_fallthru
      _
    %s670 = scalar_lea.vmem [#allocation8], 16
    %671 = vst [vmem:[%s670] sm:$0xff] %v647
    %672 = vst [vmem:[%s670 + $0x8] sm:$0xff] %v649
    // Predicated region
    $region38: #{tpu_custom_call.1} parent=1 // pred_check
      _
    $region39: #{tpu_custom_call.1} parent=1 // pred_check_branch
      %674 = sbr.rel (0) target = $region41
    $region40: #{tpu_custom_call.1} parent=1 // pred_region
      %s676 = ssub.s32 512, 512
      %677 = vsyncadd [#allocation5], %s676
      %s678 = sshll.u32 [#allocation8], 4
      %s679 = int_to_ptr.vmem [resolvable:$true] %s678
      %684 = dma.vmem_to_hbm [thread:$0]  %s679, 512, %s4, [#allocation5], 256, 256, 16
    $region41: #{tpu_custom_call.1} parent=1 // pred_fallthru
      _
    // Predicated region
    $region42: #{tpu_custom_call.1} parent=1 // pred_check
      _
    $region43: #{tpu_custom_call.1} parent=1 // pred_check_branch
      %686 = sbr.rel (0) target = $region45
    $region44: #{tpu_custom_call.1} parent=1 // pred_region
      %687 = dma.done [#allocation5], 512
    $region45: #{tpu_custom_call.1} parent=1 // pred_fallthru
      _
    %688 = vsyncpa [#allocation4], 1
    %689 = vsyncpa [#allocation7], 1
    %690 = vsyncpa [#allocation5], 1

</llo_original>
